<compile_context>
chip_gen: v6e
topology: v6e:2x2x1
jax: 0.10.0
libtpu: 0.0.40
codegen_flags: <defaults>
</compile_context>

<pallas_src>
import functools
import math

import jax
import jax.numpy as jnp
from jax.experimental import pallas as pl
from jax.experimental.pallas import tpu as pltpu


def make_positional_encoding(d_model, max_len=5000, dtype=jnp.float32):
    """pe buffer exactly as in the PyTorch __init__: shape (max_len, 1, d_model)."""
    position = jnp.arange(max_len, dtype=jnp.float32)[:, None]                 # (max_len, 1)
    div_term = jnp.exp(
        jnp.arange(0, d_model, 2, dtype=jnp.float32) * (-math.log(10000.0) / d_model)
    )                                                                          # (d_model/2,)
    pe = jnp.zeros((max_len, d_model), jnp.float32)
    pe = pe.at[:, 0::2].set(jnp.sin(position * div_term))
    pe = pe.at[:, 1::2].set(jnp.cos(position * div_term))
    return pe[:, None, :].astype(dtype)                                        # (max_len, 1, d_model)


def _pe_dropout_kernel(seed_ref, x_ref, pe_ref, o_ref, *,
                       p, training, s_tile, batch, d_model, hash_rounds):
    # (s_tile, B, D) + (s_tile, 1, D): pe broadcasts over the batch (sublane)
    # axis implicitly -- no jnp.tile, no full-width temporary.  Add in f32 to
    # match torch's promotion of x + fp32 pe.
    y = x_ref[...].astype(jnp.float32) + pe_ref[...].astype(jnp.float32)

    if training and p > 0.0:
        shape = y.shape                                   # (s_tile, B, D)
        # Global element index, row-major over the logical (S, B, D) array;
        # identical stream regardless of tiling.
        row_off = (pl.program_id(0) * s_tile).astype(jnp.uint32)
        r = jax.lax.broadcasted_iota(jnp.uint32, shape, 0) + row_off
        b = jax.lax.broadcasted_iota(jnp.uint32, shape, 1)
        d = jax.lax.broadcasted_iota(jnp.uint32, shape, 2)
        idx = (r * jnp.uint32(batch) + b) * jnp.uint32(d_model) + d
        # lowbias32-style mix of (index, seed) -> uniform uint32 bits.
        h = idx ^ (seed_ref[0].astype(jnp.uint32) * jnp.uint32(0x9E3779B9))
        h = h ^ (h >> jnp.uint32(16))
        h = h * jnp.uint32(0x7FEB352D)
        h = h ^ (h >> jnp.uint32(15))
        if hash_rounds >= 3:                              # trimmed for bf16/fp16 (VALU relief on v7x)
            h = h * jnp.uint32(0x846CA68B)
            h = h ^ (h >> jnp.uint32(16))
        threshold = jnp.uint32(min(int(round(p * 4294967296.0)), 4294967295))
        keep = h >= threshold                             # P(drop) = p, single uint32 compare
        y = jnp.where(keep, y * jnp.float32(1.0 / (1.0 - p)), jnp.zeros_like(y))

    o_ref[...] = y.astype(o_ref.dtype)


def _choose_s_tile(seq_len, bytes_per_seq_row):
    """Pick the seq-tile so the pipeline has enough steps AND blocks stay big.

    - tiny problems (<= ~1 MiB): a single block, per-step overhead dominates.
    - otherwise: ~4 MiB blocks, but capped so there are >= 4 grid steps
      (keeps DMA/compute overlap everywhere, and lets the "parallel" axis
      shard across v7x's two TensorCores).
    """
    total = seq_len * bytes_per_seq_row
    if total <= (1 << 20):
        return seq_len
    t = max(8, ((4 << 20) // max(bytes_per_seq_row, 1)) // 8 * 8)
    min_steps = 4
    cap = max(8, (-(-seq_len // min_steps)) // 8 * 8)
    t = min(t, cap)
    return max(1, min(t, seq_len))


def positional_encoding_forward(x, pe, *, p=0.1, training=False, seed=0, donate_x=False):
    """x: (seq_len, batch, d_model); pe: (max_len, 1, d_model) from make_positional_encoding."""
    S, B, D = x.shape
    assert pe.ndim == 3 and pe.shape[0] >= S and pe.shape[1] == 1 and pe.shape[2] == D
    # Match torch promotion (bf16 x + f32 pe -> f32 output); no wrapper-side
    # cast/reshape of the full max_len pe buffer -- the kernel only DMAs rows [0, S).
    out_dtype = jnp.result_type(x.dtype, pe.dtype)

    s_tile = _choose_s_tile(S, B * D * x.dtype.itemsize)
    grid = (pl.cdiv(S, s_tile),)
    seed_arr = jnp.asarray([seed], dtype=jnp.int32)

    kernel = functools.partial(
        _pe_dropout_kernel,
        p=float(p), training=bool(training),
        s_tile=s_tile, batch=B, d_model=D,
        hash_rounds=3 if x.dtype.itemsize >= 4 else 2,
    )

    grid_spec = pltpu.PrefetchScalarGridSpec(
        num_scalar_prefetch=1,  # seed lands in SMEM
        grid=grid,
        in_specs=[
            # TODO(synk): optionally sweep pipeline_mode=pl.Buffered(3) on x/out for v7x HBM jitter.
            pl.BlockSpec((s_tile, B, D), lambda i, seed_ref: (i, 0, 0)),   # x tile
            pl.BlockSpec((s_tile, 1, D), lambda i, seed_ref: (i, 0, 0)),   # pe rows [0, S)
        ],
        out_specs=pl.BlockSpec((s_tile, B, D), lambda i, seed_ref: (i, 0, 0)),
    )

    io_aliases = {}
    if donate_x and x.dtype == out_dtype:
        # operand indices include the scalar-prefetch seed, so x is input 1.
        io_aliases = {1: 0}

    out = pl.pallas_call(
        kernel,
        out_shape=jax.ShapeDtypeStruct((S, B, D), out_dtype),
        grid_spec=grid_spec,
        input_output_aliases=io_aliases,
        compiler_params=pltpu.CompilerParams(
            dimension_semantics=("parallel",),      # independent S-tiles; v7x splits across 2 TCs
            vmem_limit_bytes=32 * 1024 * 1024,      # 2x(4 MiB in + 4 MiB out) double-buffered fits easily
        ),
    )(seed_arr, x, pe)
    return out


if __name__ == "__main__":
    key = jax.random.PRNGKey(0)
    P = 0.1

    # Small shapes consistent with the module: seq=8, batch=4, d_model=128.
    S, B, D = 8, 4, 128
    MAX_LEN = 64  # module default is 5000; smaller here, same construction
    x = jax.random.normal(key, (S, B, D), dtype=jnp.float32)
    pe = make_positional_encoding(D, max_len=MAX_LEN)

    ref = x + pe[:S]  # broadcast over batch, like `x + self.pe[:x.size(0), :, :]`

    # Eval mode: dropout is identity.
    out_eval = jax.block_until_ready(
        positional_encoding_forward(x, pe, p=P, training=False)
    )
    assert out_eval.shape == (S, B, D)
    assert jnp.allclose(out_eval, ref, atol=1e-6), "eval-mode mismatch"

    # Training mode: every element is either 0 (dropped) or ref / (1 - p).
    out_train = jax.block_until_ready(
        positional_encoding_forward(x, pe, p=P, training=True, seed=42)
    )
    assert out_train.shape == (S, B, D)
    dropped = out_train == 0.0
    kept_ok = jnp.where(dropped, True, jnp.isclose(out_train, ref / (1.0 - P), atol=1e-5))
    assert bool(jnp.all(kept_ok)), "training-mode values mismatch"
    frac = float(jnp.mean(dropped.astype(jnp.float32)))
    assert 0.0 < frac < 1.0, "dropout mask degenerate"

    # Larger sequence: exercises the multi-step pipelined grid (4 steps here).
    S2, B2, D2 = 320, 8, 128
    x2 = jax.random.normal(jax.random.PRNGKey(1), (S2, B2, D2), dtype=jnp.float32)
    pe_big = make_positional_encoding(D2, max_len=512)
    out_big = jax.block_until_ready(
        positional_encoding_forward(x2, pe_big, p=P, training=False)
    )
    assert out_big.shape == (S2, B2, D2)
    assert jnp.allclose(out_big, x2 + pe_big[:S2], atol=1e-6), "multi-tile mismatch"

    print("KERNEL_OK")
</pallas_src>

<mosaic_0001>
module attributes {stable_mosaic.version = 11 : i64} {
  func.func @_pe_dropout_kernel(%arg0: i32, %arg1: memref<1xi32, #tpu.memory_space<smem>>, %arg2: memref<8x4x128xf32, #tpu.memory_space<vmem>>, %arg3: memref<8x1x128xf32, #tpu.memory_space<vmem>>, %arg4: memref<8x4x128xf32, #tpu.memory_space<vmem>>) attributes {dimension_semantics = [#tpu.dimension_semantics<parallel>], iteration_bounds = array<i64: 1>, scalar_prefetch = 1 : i64, scratch_operands = 0 : i64, tpu.core_type = #tpu.core_type<tc>, window_params = [{transform_indices = @transform_0, window_bounds = array<i64: 8, 4, 128>}, {transform_indices = @transform_1, window_bounds = array<i64: 8, 1, 128>}, {transform_indices = @transform_2, window_bounds = array<i64: 8, 4, 128>}]} {
    %c0 = arith.constant 0 : index
    %c0_0 = arith.constant 0 : index
    %c0_1 = arith.constant 0 : index
    %0 = vector.load %arg2[%c0, %c0_0, %c0_1] : memref<8x4x128xf32, #tpu.memory_space<vmem>>, vector<8x4x128xf32>
    %c0_2 = arith.constant 0 : index
    %c0_3 = arith.constant 0 : index
    %c0_4 = arith.constant 0 : index
    %1 = vector.load %arg3[%c0_2, %c0_3, %c0_4] : memref<8x1x128xf32, #tpu.memory_space<vmem>>, vector<8x1x128xf32>
    %2 = vector.broadcast %1 : vector<8x1x128xf32> to vector<8x4x128xf32>
    %3 = arith.addf %0, %2 : vector<8x4x128xf32>
    %c0_5 = arith.constant 0 : index
    %c0_6 = arith.constant 0 : index
    %c0_7 = arith.constant 0 : index
    %4 = vector.load %arg4[%c0_5, %c0_6, %c0_7] : memref<8x4x128xf32, #tpu.memory_space<vmem>>, vector<8x4x128xf32>
    tpu.vector_store %arg4[%c0_5, %c0_6, %c0_7], %3 {strides = array<i32>} : memref<8x4x128xf32, #tpu.memory_space<vmem>>, vector<8x4x128xf32>,
    return
  }
  func.func @transform_0(%arg0: i32, %arg1: memref<1xi32, #tpu.memory_space<smem>>) -> (i32, i32, i32) {
    %c0_i32 = arith.constant 0 : i32
    %c0_i32_0 = arith.constant 0 : i32
    %c0_i32_1 = arith.constant 0 : i32
    return %arg0, %c0_i32, %c0_i32_0 : i32, i32, i32
  }
  func.func @transform_1(%arg0: i32, %arg1: memref<1xi32, #tpu.memory_space<smem>>) -> (i32, i32, i32) {
    %c0_i32 = arith.constant 0 : i32
    %c0_i32_0 = arith.constant 0 : i32
    %c0_i32_1 = arith.constant 0 : i32
    return %arg0, %c0_i32, %c0_i32_0 : i32, i32, i32
  }
  func.func @transform_2(%arg0: i32, %arg1: memref<1xi32, #tpu.memory_space<smem>>) -> (i32, i32, i32) {
    %c0_i32 = arith.constant 0 : i32
    %c0_i32_0 = arith.constant 0 : i32
    %c0_i32_1 = arith.constant 0 : i32
    return %arg0, %c0_i32, %c0_i32_0 : i32, i32, i32
  }
}

</mosaic_0001>

<llo_original>
// kernel: tpu_custom_call.1
$region0: #{tpu_custom_call.1}
  #allocation0 [shape = 'u32[]', space=smem, size = 0x4, offset = 0x4, fixed_abs, tag = 'smem constant byte address 0x4 - core index']
  #allocation1 [shape = 'u32[144,128]{1,0:T(1,128)}', space=vmem, size = 0x12000, scoped, tag = 'internal scratch']
  #allocation2 [shape = 's32[1]{0}', space=sflag, size = 0x4, scoped, tag = 'scoped memory for tpu_custom_call.1']
  #allocation3 [shape = 's32[1]{0:T(128)S(6)}', space=smem, size = 0x200, scoped, tag = 'prefetched SMEM operand 0']
  %s0 = inlined_call_operand.<no memory space> [shape: s32[1], index: 0, kind: input, shape index: {}]
  %s1 = inlined_call_operand.hbm [shape: f32[8,4,128], index: 1, kind: input, shape index: {}]
  %s2 = inlined_call_operand.hbm [shape: f32[64,1,128], index: 2, kind: input, shape index: {}]
  %s3 = inlined_call_operand.hbm [shape: f32[8,4,128], index: 3, kind: output, shape index: {}]
  %s4 = sld [smem:[#allocation0]]
  $region26: #{tpu_custom_call.1} parent=0
    _
  %s6 = ssub.s32 1, %s4
  %s7 = scalar_select 0, %s6, %s4
  %8 = sst [smem:[#allocation3]] %s0
  $region1: #{tpu_custom_call.1} parent=0
    #allocation4 [shape = 'u8[16384]{0}', space=vmem, size = 0x4000, scoped, tag = 'input window, operand 1, single buffered']
    #allocation5 [shape = 's32[1]{0}', space=sflag, size = 0x4, scoped, tag = 'scoped memory for tpu_custom_call.1']
    #allocation6 [shape = 's32[1]{0}', space=sflag, size = 0x4, scoped, tag = 'scoped memory for tpu_custom_call.1']
    #allocation7 [shape = 'u8[4096]{0}', space=vmem, size = 0x1000, scoped, tag = 'input window, operand 2, single buffered']
    #allocation8 [shape = 's32[1]{0}', space=sflag, size = 0x4, scoped, tag = 'scoped memory for tpu_custom_call.1']
    #allocation9 [shape = 'u8[16384]{0}', space=vmem, size = 0x4000, scoped, tag = 'output window, operand 0, single buffered']
    %9 = vsyncpa [#allocation5], 0
    %10 = vsyncpa [#allocation8], 0
    %11 = vsyncpa [#allocation6], 0
    // Predicated region
    $region2: #{tpu_custom_call.1} parent=1 // pred_check
      _
    $region3: #{tpu_custom_call.1} parent=1 // pred_check_branch
      %13 = sbr.rel (0) target = $region5
    $region4: #{tpu_custom_call.1} parent=1 // pred_region
      %s15 = ssub.s32 512, 512
      %16 = vsyncadd [#allocation5], %s15
      %s17 = sshll.u32 [#allocation4], 4
      %s18 = int_to_ptr.vmem [resolvable:$true] %s17
      %23 = dma.hbm_to_vmem [thread:$0]  %s1, 512, %s18, [#allocation5], 64, 64, 4
    $region5: #{tpu_custom_call.1} parent=1 // pred_fallthru
      _
    // Predicated region
    $region6: #{tpu_custom_call.1} parent=1 // pred_check
      _
    $region7: #{tpu_custom_call.1} parent=1 // pred_check_branch
      %25 = sbr.rel (0) target = $region9
    $region8: #{tpu_custom_call.1} parent=1 // pred_region
      %s27 = ssub.s32 128, 128
      %28 = vsyncadd [#allocation8], %s27
      %s29 = sshll.u32 [#allocation7], 4
      %s30 = int_to_ptr.vmem [resolvable:$true] %s29
      %35 = dma.hbm_to_vmem [thread:$0]  %s2, 128, %s30, [#allocation8], 16, 16, 1
    $region9: #{tpu_custom_call.1} parent=1 // pred_fallthru
      _
    // Predicated region
    $region10: #{tpu_custom_call.1} parent=1 // pred_check
      _
    $region11: #{tpu_custom_call.1} parent=1 // pred_check_branch
      %37 = sbr.rel (0) target = $region13
    $region12: #{tpu_custom_call.1} parent=1 // pred_region
      %38 = dma.done [#allocation5], 512
    $region13: #{tpu_custom_call.1} parent=1 // pred_fallthru
      _
    // Predicated region
    $region14: #{tpu_custom_call.1} parent=1 // pred_check
      _
    $region15: #{tpu_custom_call.1} parent=1 // pred_check_branch
      %40 = sbr.rel (0) target = $region17
    $region16: #{tpu_custom_call.1} parent=1 // pred_region
      %41 = dma.done [#allocation8], 128
    $region17: #{tpu_custom_call.1} parent=1 // pred_fallthru
      _
    %v42 = vld [vmem:[#allocation4] sm:$0xf]
    %v43 = vld [vmem:[#allocation4 + $0x4] sm:$0xf]
    %v44 = vld [vmem:[#allocation4 + $0x8] sm:$0xf]
    %v45 = vld [vmem:[#allocation4 + $0xc] sm:$0xf]
    %v46 = vld [vmem:[#allocation4 + $0x10] sm:$0xf]
    %v47 = vld [vmem:[#allocation4 + $0x14] sm:$0xf]
    %v48 = vld [vmem:[#allocation4 + $0x18] sm:$0xf]
    %v49 = vld [vmem:[#allocation4 + $0x1c] sm:$0xf]
    %v50 = vld [vmem:[#allocation7] sm:$0x1]
    %v51 = vld [vmem:[#allocation7 + $0x1] sm:$0x1]
    %v52 = vld [vmem:[#allocation7 + $0x2] sm:$0x1]
    %v53 = vld [vmem:[#allocation7 + $0x3] sm:$0x1]
    %v54 = vld [vmem:[#allocation7 + $0x4] sm:$0x1]
    %v55 = vld [vmem:[#allocation7 + $0x5] sm:$0x1]
    %v56 = vld [vmem:[#allocation7 + $0x6] sm:$0x1]
    %v57 = vld [vmem:[#allocation7 + $0x7] sm:$0x1]
    %v66 = vlaneseq
    %v67 = vshrl.u32 %v66, 7
    %v68 = vsub.s32 0, %v67
    %v69 = vrot.slane %v50, %v68
    %v70 = vlaneseq
    %v71 = vshrl.u32 %v70, 7
    %v72 = vsub.s32 0, %v71
    %v73 = vrot.slane %v51, %v72
    %v74 = vlaneseq
    %v75 = vshrl.u32 %v74, 7
    %v76 = vsub.s32 0, %v75
    %v77 = vrot.slane %v52, %v76
    %v78 = vlaneseq
    %v79 = vshrl.u32 %v78, 7
    %v80 = vsub.s32 0, %v79
    %v81 = vrot.slane %v53, %v80
    %v82 = vlaneseq
    %v83 = vshrl.u32 %v82, 7
    %v84 = vsub.s32 0, %v83
    %v85 = vrot.slane %v54, %v84
    %v86 = vlaneseq
    %v87 = vshrl.u32 %v86, 7
    %v88 = vsub.s32 0, %v87
    %v89 = vrot.slane %v55, %v88
    %v90 = vlaneseq
    %v91 = vshrl.u32 %v90, 7
    %v92 = vsub.s32 0, %v91
    %v93 = vrot.slane %v56, %v92
    %v94 = vlaneseq
    %v95 = vshrl.u32 %v94, 7
    %v96 = vsub.s32 0, %v95
    %v97 = vrot.slane %v57, %v96
    %v106 = vadd.f32 %v42, %v69
    %v107 = vadd.f32 %v43, %v73
    %v108 = vadd.f32 %v44, %v77
    %v109 = vadd.f32 %v45, %v81
    %v110 = vadd.f32 %v46, %v85
    %v111 = vadd.f32 %v47, %v89
    %v112 = vadd.f32 %v48, %v93
    %v113 = vadd.f32 %v49, %v97
    %114 = vst [vmem:[#allocation9] sm:$0xf] %v106
    %115 = vst [vmem:[#allocation9 + $0x4] sm:$0xf] %v107
    %116 = vst [vmem:[#allocation9 + $0x8] sm:$0xf] %v108
    %117 = vst [vmem:[#allocation9 + $0xc] sm:$0xf] %v109
    %118 = vst [vmem:[#allocation9 + $0x10] sm:$0xf] %v110
    %119 = vst [vmem:[#allocation9 + $0x14] sm:$0xf] %v111
    %120 = vst [vmem:[#allocation9 + $0x18] sm:$0xf] %v112
    %121 = vst [vmem:[#allocation9 + $0x1c] sm:$0xf] %v113
    // Predicated region
    $region18: #{tpu_custom_call.1} parent=1 // pred_check
      _
    $region19: #{tpu_custom_call.1} parent=1 // pred_check_branch
      %123 = sbr.rel (0) target = $region21
    $region20: #{tpu_custom_call.1} parent=1 // pred_region
      %s125 = ssub.s32 512, 512
      %126 = vsyncadd [#allocation6], %s125
      %s127 = sshll.u32 [#allocation9], 4
      %s128 = int_to_ptr.vmem [resolvable:$true] %s127
      %133 = dma.vmem_to_hbm [thread:$0]  %s128, 512, %s3, [#allocation6], 64, 64, 4
    $region21: #{tpu_custom_call.1} parent=1 // pred_fallthru
      _
    // Predicated region
    $region22: #{tpu_custom_call.1} parent=1 // pred_check
      _
    $region23: #{tpu_custom_call.1} parent=1 // pred_check_branch
      %135 = sbr.rel (0) target = $region25
    $region24: #{tpu_custom_call.1} parent=1 // pred_region
      %136 = dma.done [#allocation6], 512
    $region25: #{tpu_custom_call.1} parent=1 // pred_fallthru
      _
    %137 = vsyncpa [#allocation5], 1
    %138 = vsyncpa [#allocation8], 1
    %139 = vsyncpa [#allocation6], 1

</llo_original>
